<compile_context>
chip_gen: v7x
topology: tpu7x:2x2x1
jax: 0.10.0
libtpu: 0.0.40
codegen_flags: <defaults>
</compile_context>

<pallas_src>
import jax
import jax.numpy as jnp
from jax import lax
from jax.experimental import pallas as pl
from jax.experimental.pallas import tpu as pltpu


_LANE = 128     # TPU lane width: gate slabs / FC output are padded to this
_SUBLANE = 8    # f32 sublane count: batch is padded to this


def _round_up(x, m):
    return (x + m - 1) // m * m


def _sigmoid(x):
    # sigmoid(x) = 0.5 * tanh(0.5 * x) + 0.5  -> one EUP tanh, no exp/divide.
    return 0.5 * jnp.tanh(0.5 * x) + 0.5


def lstm_classifier_kernel(x_ref, wih_ref, whh_ref, b_ref, wfc_ref, bfc_ref,
                           out_ref, h_scr, c_scr, xp_scr):
    """One grid step = one batch block x one chunk of t_blk timesteps.

    x_ref   : (t_blk*Bb, I)     time-major input chunk (matmul dtype)
    wih_ref : (I, 4*Hp)         input->gate weights (gate slabs lane aligned)
    whh_ref : (Hp, 4*Hp)        hidden->gate weights
    b_ref   : (1, 4*Hp)         combined LSTM bias (b_ih + b_hh), f32
    wfc_ref : (Hp, 128)         FC weights; columns [0:2] real, rest zero
    bfc_ref : (1, 128)          FC bias, zero padded, f32
    out_ref : (Bb, 128)         lane-dense padded logits (f32)
    h_scr, c_scr : (Bb, Hp)     recurrent f32 state, persistent across chunks
    xp_scr  : (t_blk*Bb, 4*Hp)  precomputed f32 input projection for this chunk
    """
    chunk = pl.program_id(1)
    Bb, Hp = h_scr.shape
    t_blk = x_ref.shape[0] // Bb

    @pl.when(chunk == 0)
    def _():
        h_scr[...] = jnp.zeros_like(h_scr)
        c_scr[...] = jnp.zeros_like(c_scr)

    # Input projection for every timestep of the chunk in ONE MXU matmul, with
    # the bias folded in -> hoisted out of the serial recurrence below.
    xp_scr[...] = (
        jnp.dot(x_ref[...], wih_ref[...], preferred_element_type=jnp.float32)
        + b_ref[...])

    whh = whh_ref[...]  # hoist the (grid-invariant) weight load out of the loop

    def step(t, carry):
        h, c = carry
        row = pl.multiple_of(t * Bb, Bb)       # sublane-aligned dynamic slice
        gates = xp_scr[pl.ds(row, Bb), :] + jnp.dot(
            h.astype(whh.dtype), whh, preferred_element_type=jnp.float32)
        # Gate slabs are Hp(=k*128)-lane aligned -> clean full-vreg VPU/EUP ops.
        i_g = _sigmoid(gates[:, 0 * Hp:1 * Hp])
        f_g = _sigmoid(gates[:, 1 * Hp:2 * Hp])
        g_g = jnp.tanh(gates[:, 2 * Hp:3 * Hp])
        o_g = _sigmoid(gates[:, 3 * Hp:4 * Hp])
        c_new = f_g * c + i_g * g_g
        h_new = o_g * jnp.tanh(c_new)
        return h_new, c_new

    # Bounded unroll: scheduling window without spilling the 64 vregs.
    h, c = lax.fori_loop(0, t_blk, step, (h_scr[...], c_scr[...]),
                         unroll=min(4, t_blk))
    h_scr[...] = h
    c_scr[...] = c

    @pl.when(chunk == pl.num_programs(1) - 1)
    def _():
        # logits = h_T @ W_fc^T + b_fc, written once as a lane-dense (Bb, 128)
        # block (real logits live in columns [:2]; the wrapper slices them).
        out_ref[...] = (jnp.dot(h.astype(wfc_ref.dtype), wfc_ref[...],
                                preferred_element_type=jnp.float32)
                        + bfc_ref[...])


def _pad_gate_cols(w, H, Hp):
    """Pad each of the 4 (i, f, g, o) gate column slabs from H to Hp columns."""
    if H == Hp:
        return w
    pad = [(0, 0)] * (w.ndim - 1) + [(0, Hp - H)]
    return jnp.concatenate(
        [jnp.pad(w[..., g * H:(g + 1) * H], pad) for g in range(4)], axis=-1)


def _pick_t_block(T, Bb, Hp, budget_bytes, min_chunks):
    """Largest divisor of T giving >= min_chunks chunks and an xp scratch
    (t_block*Bb*4*Hp f32) within the VMEM budget."""
    best = 1
    for tb in range(1, T + 1):
        if T % tb:
            continue
        chunks = T // tb
        xp_bytes = tb * Bb * 4 * Hp * 4
        if xp_bytes <= budget_bytes and chunks >= min(min_chunks, T):
            best = tb
    return best


def lstm_classifier_forward(x, params, *, t_block=None,
                            matmul_dtype=jnp.bfloat16,
                            split_batch=True,
                            xp_budget_bytes=16 * 1024 * 1024,
                            min_chunks=4):
    """x: (B, T, I) float32.  Returns logits (B, 2) matching the PyTorch module."""
    B, T, I = x.shape
    H = params["w_hh_t"].shape[0]
    Hp = _round_up(H, _LANE)      # lane-aligned gate slabs

    # v7x: split the padded batch over the two TensorCores when there is enough
    # real batch.  Otherwise keep one block (extra rows ride the MXU for free).
    nB = 2 if (split_batch and B >= 16) else 1
    Bb = _round_up(-(-B // nB), _SUBLANE)
    Bp = nB * Bb

    if t_block is None:
        t_block = _pick_t_block(T, Bb, Hp, xp_budget_bytes, min_chunks)
    assert T % t_block == 0, "t_block must divide T"
    num_chunks = T // t_block

    # ---- wrapper-side layout plumbing (pure XLA, zero-padding is exact) ----
    wih = _pad_gate_cols(params["w_ih_t"], H, Hp).astype(matmul_dtype)    # (I, 4Hp)
    whh = jnp.pad(_pad_gate_cols(params["w_hh_t"], H, Hp),
                  ((0, Hp - H), (0, 0))).astype(matmul_dtype)             # (Hp, 4Hp)
    b = _pad_gate_cols(params["b"], H, Hp).astype(jnp.float32)            # (1, 4Hp)
    wfc = jnp.pad(params["w_fc_t"],
                  ((0, Hp - H), (0, _LANE - 2))).astype(matmul_dtype)     # (Hp, 128)
    bfc = jnp.pad(params["b_fc"],
                  ((0, 0), (0, _LANE - 2))).astype(jnp.float32)           # (1, 128)

    # (B,T,I) -> (nB, T*Bb, I): per batch-block, time-major, so every chunk is
    # a contiguous sublane-aligned 2-D row slab (no in-kernel reshape needed).
    x_p = jnp.pad(x, ((0, Bp - B), (0, 0), (0, 0))).astype(matmul_dtype)
    x_blk = x_p.reshape(nB, Bb, T, I).transpose(0, 2, 1, 3).reshape(nB, T * Bb, I)

    # VMEM budget (v7x has only 64 MiB physical; default scoped limit 16/32 MiB).
    msz = jnp.dtype(matmul_dtype).itemsize
    vmem_need = (
        2 * (t_block * Bb * I * msz)                         # 2x-buffered x chunks
        + ((I + Hp) * 4 * Hp + Hp * _LANE) * msz             # single-buffered weights
        + (4 * Hp + _LANE) * 4                               # biases (f32)
        + (t_block * Bb * 4 * Hp + 2 * Bb * Hp) * 4          # xp / h / c scratch
        + 2 * (Bb * _LANE * 4))                              # out block
    vmem_limit = int(min(max(2 * vmem_need, 32 * 1024 * 1024), 64 * 1024 * 1024))

    inv = dict(pipeline_mode=pl.Buffered(1))  # grid-invariant: no double-buffer

    grid_spec = pltpu.PrefetchScalarGridSpec(
        num_scalar_prefetch=0,
        grid=(nB, num_chunks),
        in_specs=[
            pl.BlockSpec((None, t_block * Bb, I), lambda nb, c: (nb, c, 0)),  # x chunk
            pl.BlockSpec((I, 4 * Hp), lambda nb, c: (0, 0), **inv),           # W_ih
            pl.BlockSpec((Hp, 4 * Hp), lambda nb, c: (0, 0), **inv),          # W_hh
            pl.BlockSpec((1, 4 * Hp), lambda nb, c: (0, 0), **inv),           # bias
            pl.BlockSpec((Hp, _LANE), lambda nb, c: (0, 0), **inv),           # W_fc
            pl.BlockSpec((1, _LANE), lambda nb, c: (0, 0), **inv),            # b_fc
        ],
        out_specs=pl.BlockSpec((None, Bb, _LANE), lambda nb, c: (nb, 0, 0)),
        scratch_shapes=[
            pltpu.VMEM((Bb, Hp), jnp.float32),                   # h state
            pltpu.VMEM((Bb, Hp), jnp.float32),                   # c state
            pltpu.VMEM((t_block * Bb, 4 * Hp), jnp.float32),     # x projection
        ],
    )

    out_padded = pl.pallas_call(
        lstm_classifier_kernel,
        out_shape=jax.ShapeDtypeStruct((nB, Bb, _LANE), jnp.float32),
        grid_spec=grid_spec,
        compiler_params=pltpu.CompilerParams(
            # Batch blocks are independent -> "parallel" (v7x megacore).
            # The time-chunk axis carries the recurrence and the resident
            # output block -> must stay "arbitrary".
            dimension_semantics=("parallel", "arbitrary"),
            vmem_limit_bytes=vmem_limit),
    )(x_blk, wih, whh, b, wfc, bfc)

    return out_padded.reshape(Bp, _LANE)[:B, :2]


def reference_forward(x, params):
    """Pure-JAX reference matching torch.nn.LSTM (gate order i,f,g,o) + Linear."""
    B, T, I = x.shape
    H = params["w_hh_t"].shape[0]
    wih_t, whh_t, b = params["w_ih_t"], params["w_hh_t"], params["b"]

    def step(carry, x_t):
        h, c = carry
        gates = x_t @ wih_t + h @ whh_t + b
        i_g = jax.nn.sigmoid(gates[:, 0 * H:1 * H])
        f_g = jax.nn.sigmoid(gates[:, 1 * H:2 * H])
        g_g = jnp.tanh(gates[:, 2 * H:3 * H])
        o_g = jax.nn.sigmoid(gates[:, 3 * H:4 * H])
        c_new = f_g * c + i_g * g_g
        h_new = o_g * jnp.tanh(c_new)
        return (h_new, c_new), None

    h0 = jnp.zeros((B, H), jnp.float32)
    c0 = jnp.zeros((B, H), jnp.float32)
    (hT, _), _ = lax.scan(step, (h0, c0), jnp.swapaxes(x, 0, 1))
    return hT @ params["w_fc_t"] + params["b_fc"]


def init_params(key, input_size, hidden_size):
    """Deterministic synthetic params with torch-LSTM shapes (transposed for matmul)."""
    k = jax.random.split(key, 6)
    s = 1.0 / jnp.sqrt(hidden_size)
    w_ih = jax.random.uniform(k[0], (4 * hidden_size, input_size), jnp.float32, -s, s)
    w_hh = jax.random.uniform(k[1], (4 * hidden_size, hidden_size), jnp.float32, -s, s)
    b_ih = jax.random.uniform(k[2], (4 * hidden_size,), jnp.float32, -s, s)
    b_hh = jax.random.uniform(k[3], (4 * hidden_size,), jnp.float32, -s, s)
    w_fc = jax.random.uniform(k[4], (2, hidden_size), jnp.float32, -s, s)
    b_fc = jax.random.uniform(k[5], (2,), jnp.float32, -s, s)
    return {
        "w_ih_t": w_ih.T,                         # (I, 4H)
        "w_hh_t": w_hh.T,                         # (H, 4H)
        "b": (b_ih + b_hh).reshape(1, -1),        # (1, 4H)
        "w_fc_t": w_fc.T,                         # (H, 2)
        "b_fc": b_fc.reshape(1, -1),              # (1, 2)
    }


if __name__ == "__main__":
    key = jax.random.PRNGKey(0)
    kx, kp, kx2 = jax.random.split(key, 3)

    # Small shapes consistent with the module: batch=2, seq=8, input=16, hidden=32.
    B, T, I, H = 2, 8, 16, 32
    x = jax.random.normal(kx, (B, T, I), jnp.float32)
    params = init_params(kp, I, H)
    ref = reference_forward(x, params)

    # f32 matmul path: tight check against the pure-JAX (torch-f32) reference.
    out_f32 = jax.block_until_ready(
        lstm_classifier_forward(x, params, matmul_dtype=jnp.float32))
    assert out_f32.shape == (B, 2)
    assert jnp.allclose(out_f32, ref, atol=1e-4, rtol=1e-4), (out_f32, ref)

    # Default bf16-operand / f32-accumulate path (MXU-friendly): looser tolerance.
    out_bf16 = jax.block_until_ready(lstm_classifier_forward(x, params))
    assert out_bf16.shape == (B, 2)
    assert jnp.allclose(out_bf16, ref, atol=3e-2, rtol=3e-2), (out_bf16, ref)

    # Larger batch exercises the 2-way batch split (v7x dual-TensorCore path).
    B2 = 16
    x2 = jax.random.normal(kx2, (B2, T, I), jnp.float32)
    ref2 = reference_forward(x2, params)
    out2 = jax.block_until_ready(
        lstm_classifier_forward(x2, params, matmul_dtype=jnp.float32))
    assert out2.shape == (B2, 2)
    assert jnp.allclose(out2, ref2, atol=1e-4, rtol=1e-4), (out2, ref2)

    print("KERNEL_OK")
</pallas_src>

<mosaic_0001>
module attributes {stable_mosaic.version = 11 : i64} {
  func.func @lstm_classifier_kernel(%arg0: i32, %arg1: i32, %arg2: memref<1x16x16xf32, #tpu.memory_space<vmem>>, %arg3: memref<16x512xf32, #tpu.memory_space<vmem>>, %arg4: memref<128x512xf32, #tpu.memory_space<vmem>>, %arg5: memref<1x512xf32, #tpu.memory_space<vmem>>, %arg6: memref<128x128xf32, #tpu.memory_space<vmem>>, %arg7: memref<1x128xf32, #tpu.memory_space<vmem>>, %arg8: memref<1x8x128xf32, #tpu.memory_space<vmem>>, %arg9: memref<8x128xf32, #tpu.memory_space<vmem>>, %arg10: memref<8x128xf32, #tpu.memory_space<vmem>>, %arg11: memref<16x512xf32, #tpu.memory_space<vmem>>) attributes {dimension_semantics = [#tpu.dimension_semantics<parallel>, #tpu.dimension_semantics<arbitrary>], iteration_bounds = array<i64: 1, 4>, scalar_prefetch = 0 : i64, scratch_operands = 3 : i64, tpu.core_type = #tpu.core_type<tc>, window_params = [{transform_indices = @transform_0, window_bounds = array<i64: 1, 16, 16>}, {pipeline_mode = #tpu.pipeline_mode<synchronous>, transform_indices = @transform_1, window_bounds = array<i64: 16, 512>}, {pipeline_mode = #tpu.pipeline_mode<synchronous>, transform_indices = @transform_2, window_bounds = array<i64: 128, 512>}, {pipeline_mode = #tpu.pipeline_mode<synchronous>, transform_indices = @transform_3, window_bounds = array<i64: 1, 512>}, {pipeline_mode = #tpu.pipeline_mode<synchronous>, transform_indices = @transform_4, window_bounds = array<i64: 128, 128>}, {pipeline_mode = #tpu.pipeline_mode<synchronous>, transform_indices = @transform_5, window_bounds = array<i64: 1, 128>}, {transform_indices = @transform_6, window_bounds = array<i64: 1, 8, 128>}]} {
    %c0_i32 = arith.constant 0 : i32
    %0 = arith.cmpi eq, %arg1, %c0_i32 : i32
    %1 = arith.extui %0 : i1 to i32
    %c0_i32_0 = arith.constant 0 : i32
    %2 = arith.cmpi ne, %1, %c0_i32_0 : i32
    scf.if %2 {
      %cst_44 = arith.constant 0.000000e+00 : f32
      %93 = vector.broadcast %cst_44 : f32 to vector<8x128xf32>
      %c0_45 = arith.constant 0 : index
      %c0_46 = arith.constant 0 : index
      %94 = vector.load %arg9[%c0_45, %c0_46] : memref<8x128xf32, #tpu.memory_space<vmem>>, vector<8x128xf32>
      tpu.vector_store %arg9[%c0_45, %c0_46], %93 {strides = array<i32>} : memref<8x128xf32, #tpu.memory_space<vmem>>, vector<8x128xf32>,
      %cst_47 = arith.constant 0.000000e+00 : f32
      %95 = vector.broadcast %cst_47 : f32 to vector<8x128xf32>
      %c0_48 = arith.constant 0 : index
      %c0_49 = arith.constant 0 : index
      %96 = vector.load %arg10[%c0_48, %c0_49] : memref<8x128xf32, #tpu.memory_space<vmem>>, vector<8x128xf32>
      tpu.vector_store %arg10[%c0_48, %c0_49], %95 {strides = array<i32>} : memref<8x128xf32, #tpu.memory_space<vmem>>, vector<8x128xf32>,
    } else {
    }
    %c0 = arith.constant 0 : index
    %c0_1 = arith.constant 0 : index
    %c0_2 = arith.constant 0 : index
    %3 = vector.load %arg2[%c0, %c0_1, %c0_2] : memref<1x16x16xf32, #tpu.memory_space<vmem>>, vector<1x16x16xf32>
    %4 = vector.shape_cast %3 : vector<1x16x16xf32> to vector<16x16xf32>
    %c0_3 = arith.constant 0 : index
    %c0_4 = arith.constant 0 : index
    %5 = vector.load %arg3[%c0_3, %c0_4] : memref<16x512xf32, #tpu.memory_space<vmem>>, vector<16x512xf32>
    %cst = arith.constant dense<0.000000e+00> : vector<16x512xf32>
    %6 = tpu.matmul %4, %5, %cst {dimension_numbers = #tpu.dot_dimension_numbers<[1], [0], [0], [1], [0, 0, 1, 1], [], []>} : vector<16x16xf32>, vector<16x512xf32>, vector<16x512xf32> -> vector<16x512xf32>
    %c0_5 = arith.constant 0 : index
    %c0_6 = arith.constant 0 : index
    %7 = vector.load %arg5[%c0_5, %c0_6] : memref<1x512xf32, #tpu.memory_space<vmem>>, vector<1x512xf32>
    %8 = vector.broadcast %7 : vector<1x512xf32> to vector<16x512xf32>
    %9 = arith.addf %6, %8 : vector<16x512xf32>
    %c0_7 = arith.constant 0 : index
    %c0_8 = arith.constant 0 : index
    %10 = vector.load %arg11[%c0_7, %c0_8] : memref<16x512xf32, #tpu.memory_space<vmem>>, vector<16x512xf32>
    tpu.vector_store %arg11[%c0_7, %c0_8], %9 {strides = array<i32>} : memref<16x512xf32, #tpu.memory_space<vmem>>, vector<16x512xf32>,
    %c0_9 = arith.constant 0 : index
    %c0_10 = arith.constant 0 : index
    %11 = vector.load %arg4[%c0_9, %c0_10] : memref<128x512xf32, #tpu.memory_space<vmem>>, vector<128x512xf32>
    %c0_11 = arith.constant 0 : index
    %c0_12 = arith.constant 0 : index
    %12 = vector.load %arg9[%c0_11, %c0_12] : memref<8x128xf32, #tpu.memory_space<vmem>>, vector<8x128xf32>
    %c0_13 = arith.constant 0 : index
    %c0_14 = arith.constant 0 : index
    %13 = vector.load %arg10[%c0_13, %c0_14] : memref<8x128xf32, #tpu.memory_space<vmem>>, vector<8x128xf32>
    %c0_i32_15 = arith.constant 0 : i32
    %c8_i32 = arith.constant 8 : i32
    %14 = arith.muli %c0_i32_15, %c8_i32 : i32
    %15 = tpu.assume_multiple %14, 8 : i32
    %16 = arith.index_cast %15 : i32 to index
    %c0_16 = arith.constant 0 : index
    %17 = vector.load %arg11[%16, %c0_16] : memref<16x512xf32, #tpu.memory_space<vmem>>, vector<8x512xf32>
    %cst_17 = arith.constant dense<0.000000e+00> : vector<8x512xf32>
    %18 = tpu.matmul %12, %11, %cst_17 {dimension_numbers = #tpu.dot_dimension_numbers<[1], [0], [0], [1], [0, 0, 1, 1], [], []>} : vector<8x128xf32>, vector<128x512xf32>, vector<8x512xf32> -> vector<8x512xf32>
    %19 = arith.addf %17, %18 : vector<8x512xf32>
    %20 = vector.extract_strided_slice %19 {offsets = [0, 0], sizes = [8, 128], strides = [1, 1]} : vector<8x512xf32> to vector<8x128xf32>
    %cst_18 = arith.constant 5.000000e-01 : f32
    %21 = vector.broadcast %cst_18 : f32 to vector<8x128xf32>
    %22 = arith.mulf %21, %20 : vector<8x128xf32>
    %23 = math.tanh %22 : vector<8x128xf32>
    %cst_19 = arith.constant 5.000000e-01 : f32
    %24 = vector.broadcast %cst_19 : f32 to vector<8x128xf32>
    %25 = arith.mulf %24, %23 : vector<8x128xf32>
    %cst_20 = arith.constant 5.000000e-01 : f32
    %26 = vector.broadcast %cst_20 : f32 to vector<8x128xf32>
    %27 = arith.addf %25, %26 : vector<8x128xf32>
    %28 = vector.extract_strided_slice %19 {offsets = [0, 128], sizes = [8, 128], strides = [1, 1]} : vector<8x512xf32> to vector<8x128xf32>
    %cst_21 = arith.constant 5.000000e-01 : f32
    %29 = vector.broadcast %cst_21 : f32 to vector<8x128xf32>
    %30 = arith.mulf %29, %28 : vector<8x128xf32>
    %31 = math.tanh %30 : vector<8x128xf32>
    %cst_22 = arith.constant 5.000000e-01 : f32
    %32 = vector.broadcast %cst_22 : f32 to vector<8x128xf32>
    %33 = arith.mulf %32, %31 : vector<8x128xf32>
    %cst_23 = arith.constant 5.000000e-01 : f32
    %34 = vector.broadcast %cst_23 : f32 to vector<8x128xf32>
    %35 = arith.addf %33, %34 : vector<8x128xf32>
    %36 = vector.extract_strided_slice %19 {offsets = [0, 256], sizes = [8, 128], strides = [1, 1]} : vector<8x512xf32> to vector<8x128xf32>
    %37 = math.tanh %36 : vector<8x128xf32>
    %38 = vector.extract_strided_slice %19 {offsets = [0, 384], sizes = [8, 128], strides = [1, 1]} : vector<8x512xf32> to vector<8x128xf32>
    %cst_24 = arith.constant 5.000000e-01 : f32
    %39 = vector.broadcast %cst_24 : f32 to vector<8x128xf32>
    %40 = arith.mulf %39, %38 : vector<8x128xf32>
    %41 = math.tanh %40 : vector<8x128xf32>
    %cst_25 = arith.constant 5.000000e-01 : f32
    %42 = vector.broadcast %cst_25 : f32 to vector<8x128xf32>
    %43 = arith.mulf %42, %41 : vector<8x128xf32>
    %cst_26 = arith.constant 5.000000e-01 : f32
    %44 = vector.broadcast %cst_26 : f32 to vector<8x128xf32>
    %45 = arith.addf %43, %44 : vector<8x128xf32>
    %46 = arith.mulf %35, %13 : vector<8x128xf32>
    %47 = arith.mulf %27, %37 : vector<8x128xf32>
    %48 = arith.addf %46, %47 : vector<8x128xf32>
    %49 = math.tanh %48 : vector<8x128xf32>
    %50 = arith.mulf %45, %49 : vector<8x128xf32>
    %c1_i32 = arith.constant 1 : i32
    %c8_i32_27 = arith.constant 8 : i32
    %51 = arith.muli %c1_i32, %c8_i32_27 : i32
    %52 = tpu.assume_multiple %51, 8 : i32
    %53 = arith.index_cast %52 : i32 to index
    %c0_28 = arith.constant 0 : index
    %54 = vector.load %arg11[%53, %c0_28] : memref<16x512xf32, #tpu.memory_space<vmem>>, vector<8x512xf32>
    %cst_29 = arith.constant dense<0.000000e+00> : vector<8x512xf32>
    %55 = tpu.matmul %50, %11, %cst_29 {dimension_numbers = #tpu.dot_dimension_numbers<[1], [0], [0], [1], [0, 0, 1, 1], [], []>} : vector<8x128xf32>, vector<128x512xf32>, vector<8x512xf32> -> vector<8x512xf32>
    %56 = arith.addf %54, %55 : vector<8x512xf32>
    %57 = vector.extract_strided_slice %56 {offsets = [0, 0], sizes = [8, 128], strides = [1, 1]} : vector<8x512xf32> to vector<8x128xf32>
    %cst_30 = arith.constant 5.000000e-01 : f32
    %58 = vector.broadcast %cst_30 : f32 to vector<8x128xf32>
    %59 = arith.mulf %58, %57 : vector<8x128xf32>
    %60 = math.tanh %59 : vector<8x128xf32>
    %cst_31 = arith.constant 5.000000e-01 : f32
    %61 = vector.broadcast %cst_31 : f32 to vector<8x128xf32>
    %62 = arith.mulf %61, %60 : vector<8x128xf32>
    %cst_32 = arith.constant 5.000000e-01 : f32
    %63 = vector.broadcast %cst_32 : f32 to vector<8x128xf32>
    %64 = arith.addf %62, %63 : vector<8x128xf32>
    %65 = vector.extract_strided_slice %56 {offsets = [0, 128], sizes = [8, 128], strides = [1, 1]} : vector<8x512xf32> to vector<8x128xf32>
    %cst_33 = arith.constant 5.000000e-01 : f32
    %66 = vector.broadcast %cst_33 : f32 to vector<8x128xf32>
    %67 = arith.mulf %66, %65 : vector<8x128xf32>
    %68 = math.tanh %67 : vector<8x128xf32>
    %cst_34 = arith.constant 5.000000e-01 : f32
    %69 = vector.broadcast %cst_34 : f32 to vector<8x128xf32>
    %70 = arith.mulf %69, %68 : vector<8x128xf32>
    %cst_35 = arith.constant 5.000000e-01 : f32
    %71 = vector.broadcast %cst_35 : f32 to vector<8x128xf32>
    %72 = arith.addf %70, %71 : vector<8x128xf32>
    %73 = vector.extract_strided_slice %56 {offsets = [0, 256], sizes = [8, 128], strides = [1, 1]} : vector<8x512xf32> to vector<8x128xf32>
    %74 = math.tanh %73 : vector<8x128xf32>
    %75 = vector.extract_strided_slice %56 {offsets = [0, 384], sizes = [8, 128], strides = [1, 1]} : vector<8x512xf32> to vector<8x128xf32>
    %cst_36 = arith.constant 5.000000e-01 : f32
    %76 = vector.broadcast %cst_36 : f32 to vector<8x128xf32>
    %77 = arith.mulf %76, %75 : vector<8x128xf32>
    %78 = math.tanh %77 : vector<8x128xf32>
    %cst_37 = arith.constant 5.000000e-01 : f32
    %79 = vector.broadcast %cst_37 : f32 to vector<8x128xf32>
    %80 = arith.mulf %79, %78 : vector<8x128xf32>
    %cst_38 = arith.constant 5.000000e-01 : f32
    %81 = vector.broadcast %cst_38 : f32 to vector<8x128xf32>
    %82 = arith.addf %80, %81 : vector<8x128xf32>
    %83 = arith.mulf %72, %48 : vector<8x128xf32>
    %84 = arith.mulf %64, %74 : vector<8x128xf32>
    %85 = arith.addf %83, %84 : vector<8x128xf32>
    %86 = math.tanh %85 : vector<8x128xf32>
    %87 = arith.mulf %82, %86 : vector<8x128xf32>
    %c2_i32 = arith.constant 2 : i32
    %c0_39 = arith.constant 0 : index
    %c0_40 = arith.constant 0 : index
    %88 = vector.load %arg9[%c0_39, %c0_40] : memref<8x128xf32, #tpu.memory_space<vmem>>, vector<8x128xf32>
    tpu.vector_store %arg9[%c0_39, %c0_40], %87 {strides = array<i32>} : memref<8x128xf32, #tpu.memory_space<vmem>>, vector<8x128xf32>,
    %c0_41 = arith.constant 0 : index
    %c0_42 = arith.constant 0 : index
    %89 = vector.load %arg10[%c0_41, %c0_42] : memref<8x128xf32, #tpu.memory_space<vmem>>, vector<8x128xf32>
    tpu.vector_store %arg10[%c0_41, %c0_42], %85 {strides = array<i32>} : memref<8x128xf32, #tpu.memory_space<vmem>>, vector<8x128xf32>,
    %c3_i32 = arith.constant 3 : i32
    %90 = arith.cmpi eq, %arg1, %c3_i32 : i32
    %91 = arith.extui %90 : i1 to i32
    %c0_i32_43 = arith.constant 0 : i32
    %92 = arith.cmpi ne, %91, %c0_i32_43 : i32
    scf.if %92 {
      %c0_44 = arith.constant 0 : index
      %c0_45 = arith.constant 0 : index
      %93 = vector.load %arg6[%c0_44, %c0_45] : memref<128x128xf32, #tpu.memory_space<vmem>>, vector<128x128xf32>
      %cst_46 = arith.constant dense<0.000000e+00> : vector<8x128xf32>
      %94 = tpu.matmul %87, %93, %cst_46 {dimension_numbers = #tpu.dot_dimension_numbers<[1], [0], [0], [1], [0, 0, 1, 1], [], []>} : vector<8x128xf32>, vector<128x128xf32>, vector<8x128xf32> -> vector<8x128xf32>
      %c0_47 = arith.constant 0 : index
      %c0_48 = arith.constant 0 : index
      %95 = vector.load %arg7[%c0_47, %c0_48] : memref<1x128xf32, #tpu.memory_space<vmem>>, vector<1x128xf32>
      %96 = vector.broadcast %95 : vector<1x128xf32> to vector<8x128xf32>
      %97 = arith.addf %94, %96 : vector<8x128xf32>
      %c0_49 = arith.constant 0 : index
      %c0_50 = arith.constant 0 : index
      %c0_51 = arith.constant 0 : index
      %98 = vector.load %arg8[%c0_49, %c0_50, %c0_51] : memref<1x8x128xf32, #tpu.memory_space<vmem>>, vector<1x8x128xf32>
      %99 = vector.shape_cast %98 : vector<1x8x128xf32> to vector<8x128xf32>
      %100 = vector.shape_cast %97 : vector<8x128xf32> to vector<1x8x128xf32>
      tpu.vector_store %arg8[%c0_49, %c0_50, %c0_51], %100 {strides = array<i32>} : memref<1x8x128xf32, #tpu.memory_space<vmem>>, vector<1x8x128xf32>,
    } else {
    }
    return
  }
  func.func @transform_0(%arg0: i32, %arg1: i32) -> (i32, i32, i32) {
    %c0_i32 = arith.constant 0 : i32
    %c0_i32_0 = arith.constant 0 : i32
    return %arg0, %arg1, %c0_i32 : i32, i32, i32
  }
  func.func @transform_1(%arg0: i32, %arg1: i32) -> (i32, i32) {
    %c0_i32 = arith.constant 0 : i32
    %c0_i32_0 = arith.constant 0 : i32
    %c0_i32_1 = arith.constant 0 : i32
    return %c0_i32, %c0_i32_0 : i32, i32
  }
  func.func @transform_2(%arg0: i32, %arg1: i32) -> (i32, i32) {
    %c0_i32 = arith.constant 0 : i32
    %c0_i32_0 = arith.constant 0 : i32
    %c0_i32_1 = arith.constant 0 : i32
    return %c0_i32, %c0_i32_0 : i32, i32
  }
  func.func @transform_3(%arg0: i32, %arg1: i32) -> (i32, i32) {
    %c0_i32 = arith.constant 0 : i32
    %c0_i32_0 = arith.constant 0 : i32
    %c0_i32_1 = arith.constant 0 : i32
    return %c0_i32, %c0_i32_0 : i32, i32
  }
  func.func @transform_4(%arg0: i32, %arg1: i32) -> (i32, i32) {
    %c0_i32 = arith.constant 0 : i32
    %c0_i32_0 = arith.constant 0 : i32
    %c0_i32_1 = arith.constant 0 : i32
    return %c0_i32, %c0_i32_0 : i32, i32
  }
  func.func @transform_5(%arg0: i32, %arg1: i32) -> (i32, i32) {
    %c0_i32 = arith.constant 0 : i32
    %c0_i32_0 = arith.constant 0 : i32
    %c0_i32_1 = arith.constant 0 : i32
    return %c0_i32, %c0_i32_0 : i32, i32
  }
  func.func @transform_6(%arg0: i32, %arg1: i32) -> (i32, i32, i32) {
    %c0_i32 = arith.constant 0 : i32
    %c0_i32_0 = arith.constant 0 : i32
    %c0_i32_1 = arith.constant 0 : i32
    return %arg0, %c0_i32, %c0_i32_0 : i32, i32, i32
  }
}

</mosaic_0001>

<llo_original>
// kernel: tpu_custom_call.1
$region0: #{tpu_custom_call.1}
  #allocation0 [shape = 'u32[]', space=smem, size = 0x4, offset = 0x4, fixed_abs, tag = 'smem constant byte address 0x4 - core index']
  #allocation1 [shape = 'u32[144,128]{1,0:T(1,128)}', space=vmem, size = 0x12000, scoped, tag = 'internal scratch']
  #allocation2 [shape = 'f32[8,128]{1,0:T(8,128)}', space=vmem, size = 0x1000, scoped, tag = 'scratch operand']
  #allocation3 [shape = 'f32[8,128]{1,0:T(8,128)}', space=vmem, size = 0x1000, scoped, tag = 'scratch operand']
  #allocation4 [shape = 'f32[16,512]{1,0:T(8,128)}', space=vmem, size = 0x8000, scoped, tag = 'scratch operand']
  %s0 = inlined_call_operand.vmem [shape: f32[1,64,16], index: 0, kind: input, shape index: {}]
  %s1 = inlined_call_operand.vmem [shape: f32[16,512], index: 1, kind: input, shape index: {}]
  %s2 = inlined_call_operand.hbm [shape: f32[128,512], index: 2, kind: input, shape index: {}]
  %s3 = inlined_call_operand.vmem [shape: f32[1,512], index: 3, kind: input, shape index: {}]
  %s4 = inlined_call_operand.hbm [shape: f32[128,128], index: 4, kind: input, shape index: {}]
  %s5 = inlined_call_operand.vmem [shape: f32[1,128], index: 5, kind: input, shape index: {}]
  %s6 = inlined_call_operand.hbm [shape: f32[1,8,128], index: 6, kind: output, shape index: {}]
  %s7 = sld [smem:[#allocation0]]
  $region73: #{tpu_custom_call.1} parent=0
    _
  %s9 = ssub.s32 1, %s7
  %s10 = scalar_select 0, %s9, %s7
  $region1: #{tpu_custom_call.1} parent=0
    #allocation5 [shape = 'u8[262144]{0}', space=vmem, size = 0x40000, scoped, tag = 'input window, operand 2, single buffered']
    #allocation6 [shape = 's32[2]{0}', space=sflag, size = 0x8, scoped, tag = 'scoped memory for tpu_custom_call.1']
    #allocation7 [shape = 's32[2]{0}', space=sflag, size = 0x8, scoped, tag = 'scoped memory for tpu_custom_call.1']
    #allocation8 [shape = 'u8[65536]{0}', space=vmem, size = 0x10000, scoped, tag = 'input window, operand 4, single buffered']
    #allocation9 [shape = 's32[1]{0}', space=sflag, size = 0x4, scoped, tag = 'scoped memory for tpu_custom_call.1']
    #allocation10 [shape = 'u8[4096]{0}', space=vmem, size = 0x1000, scoped, tag = 'output window, operand 0, single buffered']
    %11 = vsyncpa [#allocation6], 0
    %12 = vsyncpa [#allocation9], 0
    %13 = vsyncpa [#allocation7], 0
    loop: start=0, step=1, limit=6
    $region2: #{tpu_custom_call.1} parent=1 // loop_pre_header
      _
    $region3: #{tpu_custom_call.1} parent=1 // loop_header
      %s15 = sphi 0, %s19
      %p16 = scmp.ge.s32.totalorder %s15, 6
      %s22 = sphi 0, %s34
      %s23 = sphi 0, %s30
      %s24 = sphi 0, %s22
      %s25 = sphi 0, %s23
      %s26 = sphi 0, %s24
      %s27 = sphi 0, %s25
      %s39 = sphi 0, %s41
      %s42 = sphi 0, %s39
      %s43 = sphi 0, %s42
      %s59 = sphi 0, %s43
      %s63 = sphi 0, %s63
      %s65 = sphi 0, %s63
      %s66 = sphi 0, %s65
      %s80 = sphi 0, %s66
      %s84 = sphi 0, %s84
      %s86 = sphi 0, %s84
      %s87 = sphi 0, %s86
      %s101 = sphi 0, %s87
      %s105 = sphi 0, %s105
      %s107 = sphi 0, %s105
      %s108 = sphi 0, %s107
      %s122 = sphi 0, %s108
      %s126 = sphi 0, %s126
      %s128 = sphi 0, %s126
      %s129 = sphi 0, %s128
      %s143 = sphi 0, %s129
      %s147 = sphi 0, %s147
      %s149 = sphi 0, %s147
      %s150 = sphi 0, %s149
      %s164 = sphi 0, %s150
      %s170 = sphi 0, %s172
      %s173 = sphi 0, %s170
      %s174 = sphi 0, %s173
      %s190 = sphi 0, %s174
    $region4: #{tpu_custom_call.1} parent=1 // loop_header_branch
      %18 = sbr.rel (%p16) target = $region8
    $region5: #{tpu_custom_call.1} parent=1 // loop_body
      %s20 = ssub.s32 %s15, 1
      %s21 = ssub.s32 %s15, 2
      %s28 = sadd.s32 1, %s23
      %p29 = scmp.ge.s32.totalorder %s28, 4
      %s30 = scalar_select %p29, 0, %s28
      %s31 = sadd.s32 1, %s22
      %s32 = scalar_select %p29, %s31, %s22
      %p33 = scmp.ge.s32.totalorder %s32, 1
      %s34 = scalar_select %p33, 0, %s32
      %s35 = ssub.s32 %s22, %s34
      %s36 = ssub.s32 %s23, %s30
      %s37 = sor.u32 %s35, %s36
      %p38 = scmp.eq.s32.totalorder %s37, 0
      %s40 = sadd.s32 %s39, 1
      %s41 = scalar_select %p38, %s39, %s40
      %p44 = pneg %p38
      %p45 = scmp.eq.s32.totalorder %s15, 3
      %p46 = por %p44, %p45
      %p47 = scmp.ne.s32.totalorder %s39, %s42
      %p48 = scmp.eq.s32.totalorder %s15, 0
      %p49 = por %p47, %p48
      %p50 = scmp.ne.s32.totalorder %s39, %s42
      %p51 = scmp.eq.s32.totalorder %s20, 3
      %p52 = por %p50, %p51
      %p53 = scmp.ne.s32.totalorder %s42, %s43
      %p54 = scmp.eq.s32.totalorder %s20, 0
      %p55 = por %p53, %p54
      %p56 = scmp.ne.s32.totalorder %s42, %s43
      %p57 = scmp.eq.s32.totalorder %s21, 3
      %p58 = por %p56, %p57
      %p60 = scmp.ne.s32.totalorder %s43, %s59
      %p61 = scmp.eq.s32.totalorder %s21, 0
      %p62 = por %p60, %p61
      %s64 = sadd.s32 %s63, 1
      %p67 = scmp.eq.s32.totalorder %s15, 3
      %p68 = scmp.ne.s32.totalorder %s63, %s65
      %p69 = scmp.eq.s32.totalorder %s15, 0
      %p70 = por %p68, %p69
      %p71 = scmp.ne.s32.totalorder %s63, %s65
      %p72 = scmp.eq.s32.totalorder %s20, 3
      %p73 = por %p71, %p72
      %p74 = scmp.ne.s32.totalorder %s65, %s66
      %p75 = scmp.eq.s32.totalorder %s20, 0
      %p76 = por %p74, %p75
      %p77 = scmp.ne.s32.totalorder %s65, %s66
      %p78 = scmp.eq.s32.totalorder %s21, 3
      %p79 = por %p77, %p78
      %p81 = scmp.ne.s32.totalorder %s66, %s80
      %p82 = scmp.eq.s32.totalorder %s21, 0
      %p83 = por %p81, %p82
      %s85 = sadd.s32 %s84, 1
      %p88 = scmp.eq.s32.totalorder %s15, 3
      %p89 = scmp.ne.s32.totalorder %s84, %s86
      %p90 = scmp.eq.s32.totalorder %s15, 0
      %p91 = por %p89, %p90
      %p92 = scmp.ne.s32.totalorder %s84, %s86
      %p93 = scmp.eq.s32.totalorder %s20, 3
      %p94 = por %p92, %p93
      %p95 = scmp.ne.s32.totalorder %s86, %s87
      %p96 = scmp.eq.s32.totalorder %s20, 0
      %p97 = por %p95, %p96
      %p98 = scmp.ne.s32.totalorder %s86, %s87
      %p99 = scmp.eq.s32.totalorder %s21, 3
      %p100 = por %p98, %p99
      %p102 = scmp.ne.s32.totalorder %s87, %s101
      %p103 = scmp.eq.s32.totalorder %s21, 0
      %p104 = por %p102, %p103
      %s106 = sadd.s32 %s105, 1
      %p109 = scmp.eq.s32.totalorder %s15, 3
      %p110 = scmp.ne.s32.totalorder %s105, %s107
      %p111 = scmp.eq.s32.totalorder %s15, 0
      %p112 = por %p110, %p111
      %p113 = scmp.ne.s32.totalorder %s105, %s107
      %p114 = scmp.eq.s32.totalorder %s20, 3
      %p115 = por %p113, %p114
      %p116 = scmp.ne.s32.totalorder %s107, %s108
      %p117 = scmp.eq.s32.totalorder %s20, 0
      %p118 = por %p116, %p117
      %p119 = scmp.ne.s32.totalorder %s107, %s108
      %p120 = scmp.eq.s32.totalorder %s21, 3
      %p121 = por %p119, %p120
      %p123 = scmp.ne.s32.totalorder %s108, %s122
      %p124 = scmp.eq.s32.totalorder %s21, 0
      %p125 = por %p123, %p124
      %s127 = sadd.s32 %s126, 1
      %p130 = scmp.eq.s32.totalorder %s15, 3
      %p131 = scmp.ne.s32.totalorder %s126, %s128
      %p132 = scmp.eq.s32.totalorder %s15, 0
      %p133 = por %p131, %p132
      %p134 = scmp.ne.s32.totalorder %s126, %s128
      %p135 = scmp.eq.s32.totalorder %s20, 3
      %p136 = por %p134, %p135
      %p137 = scmp.ne.s32.totalorder %s128, %s129
      %p138 = scmp.eq.s32.totalorder %s20, 0
      %p139 = por %p137, %p138
      %p140 = scmp.ne.s32.totalorder %s128, %s129
      %p141 = scmp.eq.s32.totalorder %s21, 3
      %p142 = por %p140, %p141
      %p144 = scmp.ne.s32.totalorder %s129, %s143
      %p145 = scmp.eq.s32.totalorder %s21, 0
      %p146 = por %p144, %p145
      %s148 = sadd.s32 %s147, 1
      %p151 = scmp.eq.s32.totalorder %s15, 3
      %p152 = scmp.ne.s32.totalorder %s147, %s149
      %p153 = scmp.eq.s32.totalorder %s15, 0
      %p154 = por %p152, %p153
      %p155 = scmp.ne.s32.totalorder %s147, %s149
      %p156 = scmp.eq.s32.totalorder %s20, 3
      %p157 = por %p155, %p156
      %p158 = scmp.ne.s32.totalorder %s149, %s150
      %p159 = scmp.eq.s32.totalorder %s20, 0
      %p160 = por %p158, %p159
      %p161 = scmp.ne.s32.totalorder %s149, %s150
      %p162 = scmp.eq.s32.totalorder %s21, 3
      %p163 = por %p161, %p162
      %p165 = scmp.ne.s32.totalorder %s150, %s164
      %p166 = scmp.eq.s32.totalorder %s21, 0
      %p167 = por %p165, %p166
      %s168 = ssub.s32 %s22, %s34
      %p169 = scmp.eq.s32.totalorder %s168, 0
      %s171 = sadd.s32 %s170, 1
      %s172 = scalar_select %p169, %s170, %s171
      %p175 = pneg %p169
      %p176 = scmp.eq.s32.totalorder %s15, 3
      %p177 = por %p175, %p176
      %p178 = scmp.ne.s32.totalorder %s170, %s173
      %p179 = scmp.eq.s32.totalorder %s15, 0
      %p180 = por %p178, %p179
      %p181 = scmp.ne.s32.totalorder %s170, %s173
      %p182 = scmp.eq.s32.totalorder %s20, 3
      %p183 = por %p181, %p182
      %p184 = scmp.ne.s32.totalorder %s173, %s174
      %p185 = scmp.eq.s32.totalorder %s20, 0
      %p186 = por %p184, %p185
      %p187 = scmp.ne.s32.totalorder %s173, %s174
      %p188 = scmp.eq.s32.totalorder %s21, 3
      %p189 = por %p187, %p188
      %p191 = scmp.ne.s32.totalorder %s174, %s190
      %p192 = scmp.eq.s32.totalorder %s21, 0
      %p193 = por %p191, %p192
      %p194 = scmp.le.s32.totalorder 1, %s15
      %p195 = scmp.lt.s32.totalorder %s15, 5
      %p196 = pnand %p194, %p195
      %p197 = pneg %p196
      // Predicated region
      $region9: #{tpu_custom_call.1} parent=5 // pred_check
        _
      $region10: #{tpu_custom_call.1} parent=5 // pred_check_branch
        %199 = sbr.rel (%p196) target = $region12
      $region11: #{tpu_custom_call.1} parent=5 // pred_region
        %s200 = ssub.s32 %s15, 1
        // Predicated region
        $region13: #{tpu_custom_call.1} parent=11 // pred_check
          %p201 = pneg %p76
        $region14: #{tpu_custom_call.1} parent=11 // pred_check_branch
          %203 = sbr.rel (%p201) target = $region16
        $region15: #{tpu_custom_call.1} parent=11 // pred_region
          _
        $region16: #{tpu_custom_call.1} parent=11 // pred_fallthru
          _
        // Predicated region
        $region17: #{tpu_custom_call.1} parent=11 // pred_check
          %p204 = pneg %p97
        $region18: #{tpu_custom_call.1} parent=11 // pred_check_branch
          %206 = sbr.rel (%p204) target = $region20
        $region19: #{tpu_custom_call.1} parent=11 // pred_region
          %s208 = ssub.s32 8192, 8192
          %209 = vsyncadd [#allocation6], %s208
          %s210 = sshll.u32 [#allocation5], 4
          %s211 = int_to_ptr.vmem [resolvable:$true] %s210
          %216 = dma.hbm_to_vmem [thread:$0]  %s2, 8192, %s211, [#allocation6], 512, 512, 32
        $region20: #{tpu_custom_call.1} parent=11 // pred_fallthru
          _
        // Predicated region
        $region21: #{tpu_custom_call.1} parent=11 // pred_check
          %p217 = pneg %p118
        $region22: #{tpu_custom_call.1} parent=11 // pred_check_branch
          %219 = sbr.rel (%p217) target = $region24
        $region23: #{tpu_custom_call.1} parent=11 // pred_region
          _
        $region24: #{tpu_custom_call.1} parent=11 // pred_fallthru
          _
        // Predicated region
        $region25: #{tpu_custom_call.1} parent=11 // pred_check
          %p220 = pneg %p139
        $region26: #{tpu_custom_call.1} parent=11 // pred_check_branch
          %222 = sbr.rel (%p220) target = $region28
        $region27: #{tpu_custom_call.1} parent=11 // pred_region
          %s224 = ssub.s32 2048, 2048
          %225 = vsyncadd [#allocation9], %s224
          %s226 = sshll.u32 [#allocation8], 4
          %s227 = int_to_ptr.vmem [resolvable:$true] %s226
          %232 = dma.hbm_to_vmem [thread:$0]  %s4, 2048, %s227, [#allocation9], 128, 128, 8
        $region28: #{tpu_custom_call.1} parent=11 // pred_fallthru
          _
        // Predicated region
        $region29: #{tpu_custom_call.1} parent=11 // pred_check
          %p233 = pneg %p160
        $region30: #{tpu_custom_call.1} parent=11 // pred_check_branch
          %235 = sbr.rel (%p233) target = $region32
        $region31: #{tpu_custom_call.1} parent=11 // pred_region
          _
        $region32: #{tpu_custom_call.1} parent=11 // pred_fallthru
          _
      $region12: #{tpu_custom_call.1} parent=5 // pred_fallthru
        _
      %p236 = scmp.lt.s32.totalorder %s15, 4
      // Predicated region
      $region33: #{tpu_custom_call.1} parent=5 // pred_check
        %p237 = pneg %p236
      $region34: #{tpu_custom_call.1} parent=5 // pred_check_branch
        %239 = sbr.rel (%p237) target = $region36
      $region35: #{tpu_custom_call.1} parent=5 // pred_region
        // Predicated region
        $region37: #{tpu_custom_call.1} parent=35 // pred_check
          %p240 = pneg %p49
        $region38: #{tpu_custom_call.1} parent=35 // pred_check_branch
          %242 = sbr.rel (%p240) target = $region40
        $region39: #{tpu_custom_call.1} parent=35 // pred_region
          %s243 = smul.u32 2, %s23
          %p244 = scmp.lt.s32.totalorder %s22, 0
          %s245 = scalar_select %p244, %s22, 0
          %p246 = scmp.lt.s32.totalorder %s243, 7
          %s247 = scalar_select %p246, %s243, 7
          %s248 = smul.addr %s245, 8
          %s249 = sadd.s32 %s247, %s248
          %s250 = smul.addr %s249, 8
          %s251 = scalar_lea.vmem %s0, %s250
          %s252 = smul.u32 2, %s23
        $region40: #{tpu_custom_call.1} parent=35 // pred_fallthru
          _
      $region36: #{tpu_custom_call.1} parent=5 // pred_fallthru
        _
      %p253 = scmp.le.s32.totalorder 1, %s15
      %p254 = scmp.lt.s32.totalorder %s15, 5
      %p255 = pnand %p253, %p254
      %p256 = pneg %p255
      // Predicated region
      $region41: #{tpu_custom_call.1} parent=5 // pred_check
        _
      $region42: #{tpu_custom_call.1} parent=5 // pred_check_branch
        %258 = sbr.rel (%p255) target = $region44
      $region43: #{tpu_custom_call.1} parent=5 // pred_region
        %s259 = ssub.s32 %s15, 1
        // Predicated region
        $region45: #{tpu_custom_call.1} parent=43 // pred_check
          %p260 = pneg %p97
        $region46: #{tpu_custom_call.1} parent=43 // pred_check_branch
          %262 = sbr.rel (%p260) target = $region48
        $region47: #{tpu_custom_call.1} parent=43 // pred_region
          %263 = dma.done [#allocation6], 8192
        $region48: #{tpu_custom_call.1} parent=43 // pred_fallthru
          _
        // Predicated region
        $region49: #{tpu_custom_call.1} parent=43 // pred_check
          %p264 = pneg %p139
        $region50: #{tpu_custom_call.1} parent=43 // pred_check_branch
          %266 = sbr.rel (%p264) target = $region52
        $region51: #{tpu_custom_call.1} parent=43 // pred_region
          %267 = dma.done [#allocation9], 2048
        $region52: #{tpu_custom_call.1} parent=43 // pred_fallthru
          _
        %s268 = smul.u32 2, %s25
        %p269 = scmp.lt.s32.totalorder %s24, 0
        %s270 = scalar_select %p269, %s24, 0
        %p271 = scmp.lt.s32.totalorder %s268, 7
        %s272 = scalar_select %p271, %s268, 7
        %s273 = smul.addr %s270, 8
        %s274 = sadd.s32 %s272, %s273
        %s275 = smul.addr %s274, 8
        %s276 = scalar_lea.vmem %s0, %s275
        %p277 = pneg %p55
        %p278 = pneg %p52
        %p279 = pneg %p76
        %p280 = pneg %p73
        %p281 = pneg %p97
        %p282 = pneg %p94
        %p283 = pneg %p118
        %p284 = pneg %p115
        %p285 = pneg %p139
        %p286 = pneg %p136
        %p287 = pneg %p160
        %p288 = pneg %p157
        %p289 = pneg %p186
        %p290 = pneg %p183
        %s291 = smul.u32 2, %s25
        %p292 = scmp.lt.s32.totalorder %s24, 0
        %s293 = scalar_select %p292, %s24, 0
        %p294 = scmp.lt.s32.totalorder %s291, 7
        %s295 = scalar_select %p294, %s291, 7
        %s296 = smul.addr %s293, 8
        %s297 = sadd.s32 %s295, %s296
        %s298 = smul.addr %s297, 8
        %s299 = scalar_lea.vmem %s0, %s298
        %s300 = smul.u32 2, %s25
        %p301 = scmp.eq.s32.totalorder %s25, 0
        // Predicated region
        $region53: #{tpu_custom_call.1} parent=43 // pred_check
          %p302 = pneg %p301
        $region54: #{tpu_custom_call.1} parent=43 // pred_check_branch
          %304 = sbr.rel (%p302) target = $region56
        $region55: #{tpu_custom_call.1} parent=43 // pred_region
          %305 = vst [vmem:[#allocation2] sm:$0xff] 0.0
          %306 = vst [vmem:[#allocation3] sm:$0xff] 0.0
        $region56: #{tpu_custom_call.1} parent=43 // pred_fallthru
          _
        %v307 = vld [vmem:[%s299] sm:$0xff]
        %v308 = vld [vmem:[%s299 + $0x8] sm:$0xff]
        %v309 = vld [vmem:[%s1] sm:$0xff]
        %v310 = vld [vmem:[%s1 + $0x8] sm:$0xff]
        %v311 = vld [vmem:[%s1 + $0x10] sm:$0xff]
        %v312 = vld [vmem:[%s1 + $0x18] sm:$0xff]
        %v313 = vld [vmem:[%s1 + $0x20] sm:$0xff]
        %v314 = vld [vmem:[%s1 + $0x28] sm:$0xff]
        %v315 = vld [vmem:[%s1 + $0x30] sm:$0xff]
        %v316 = vld [vmem:[%s1 + $0x38] sm:$0xff]
        %v317 = vld [vmem:[%s3] sm:$0xf]
        %v319 = vlaneseq
        %v320 = vshrl.u32 %v319, 7
        %v321 = vsub.s32 0, %v320
        %v322 = vrot.slane %v317, %v321
        %v323 = vlaneseq
        %v324 = vshrl.u32 %v323, 7
        %v325 = vsub.s32 1, %v324
        %v326 = vrot.slane %v317, %v325
        %v327 = vlaneseq
        %v328 = vshrl.u32 %v327, 7
        %v329 = vsub.s32 2, %v328
        %v330 = vrot.slane %v317, %v329
        %v331 = vlaneseq
        %v332 = vshrl.u32 %v331, 7
        %v333 = vsub.s32 3, %v332
        %v334 = vrot.slane %v317, %v333
        %vm339 = vcmask 130048
        %v341 = vsel %vm339, %v307, 0
        %v344 = vsel %vm339, %v308, 0
        %346 = vmatprep.subr.mxu0 %v310
        %347 = vmatpush1.msra.mxu0 %v309
        %348 = vmatprep.subr.mxu0 %v314
        %349 = vmatpush1.msra.mxu0 %v313
        %350 = vmatprep.subr.mxu0 0.0
        %351 = vmatpush1.msra.mxu0 0.0
        %352 = vmatprep.subr.mxu0 0.0
        %353 = vmatpush1.msra.mxu0 0.0
        %354 = vmatprep.subr.mxu0 0.0
        %355 = vmatpush1.msra.mxu0 0.0
        %356 = vmatprep.subr.mxu0 0.0
        %357 = vmatpush1.msra.mxu0 0.0
        %358 = vmatprep.subr.mxu0 0.0
        %359 = vmatpush1.msra.mxu0 0.0
        %360 = vmatprep.subr.mxu0 0.0
        %361 = vmatpush1.msra.mxu0 0.0
        %362 = vmatprep.subr.mxu0 0.0
        %363 = vmatpush1.msra.mxu0 0.0
        %364 = vmatprep.subr.mxu0 0.0
        %365 = vmatpush1.msra.mxu0 0.0
        %366 = vmatprep.subr.mxu0 0.0
        %367 = vmatpush1.msra.mxu0 0.0
        %368 = vmatprep.subr.mxu0 0.0
        %369 = vmatpush1.msra.mxu0 0.0
        %370 = vmatprep.subr.mxu0 0.0
        %371 = vmatpush1.msra.mxu0 0.0
        %372 = vmatprep.subr.mxu0 0.0
        %373 = vmatpush1.msra.mxu0 0.0
        %374 = vmatprep.subr.mxu0 0.0
        %375 = vmatpush1.msra.mxu0 0.0
        %376 = vmatprep.subr.mxu0 0.0
        %377 = vmatpush1.msra.mxu0 0.0
        %378 = vmatprep.subr.mxu0 0.0
        %379 = vmatpush1.msra.mxu0 0.0
        %380 = vmatprep.subr.mxu0 0.0
        %381 = vmatpush1.msra.mxu0 0.0
        %382 = vmatprep.subr.mxu0 0.0
        %383 = vmatpush1.msra.mxu0 0.0
        %384 = vmatprep.subr.mxu0 0.0
        %385 = vmatpush1.msra.mxu0 0.0
        %386 = vmatprep.subr.mxu0 0.0
        %387 = vmatpush1.msra.mxu0 0.0
        %388 = vmatprep.subr.mxu0 0.0
        %389 = vmatpush1.msra.mxu0 0.0
        %390 = vmatprep.subr.mxu0 0.0
        %391 = vmatpush1.msra.mxu0 0.0
        %392 = vmatprep.subr.mxu0 0.0
        %393 = vmatpush1.msra.mxu0 0.0
        %394 = vmatprep.subr.mxu0 0.0
        %395 = vmatpush1.msra.mxu0 0.0
        %396 = vmatprep.subr.mxu0 0.0
        %397 = vmatpush1.msra.mxu0 0.0
        %398 = vmatprep.subr.mxu0 0.0
        %399 = vmatpush1.msra.mxu0 0.0
        %400 = vmatprep.subr.mxu0 0.0
        %401 = vmatpush1.msra.mxu0 0.0
        %402 = vmatprep.subr.mxu0 0.0
        %403 = vmatpush1.msra.mxu0 0.0
        %404 = vmatprep.subr.mxu0 0.0
        %405 = vmatpush1.msra.mxu0 0.0
        %406 = vmatprep.subr.mxu0 0.0
        %407 = vmatpush1.msra.mxu0 0.0
        %408 = vmatprep.subr.mxu0 0.0
        %409 = vmatpush1.msra.mxu0 0.0
        %410 = vmatprep.mubr.f32.mxu0 0.0
        %411 = vmatmul.mubr.f32.gmra.mrb[0].mxu0 %v341
        %v412 = vpop.f32.mrb[0].mxu0
        %v413 = vadd.f32 %v322, %v412
        %v414 = vpop.f32.mrb[0].mxu0
        %v415 = vadd.f32 %v326, %v414
        %416 = vmatprep.mubr.f32.mxu0 0.0
        %417 = vmatmul.mubr.f32.gmra.mrb[0].mxu0 %v344
        %v418 = vpop.f32.mrb[0].mxu0
        %v419 = vadd.f32 %v322, %v418
        %v420 = vpop.f32.mrb[0].mxu0
        %v421 = vadd.f32 %v326, %v420
        %422 = vdwg.mxu0
        %423 = vmatprep.subr.mxu0 %v312
        %424 = vmatpush1.msra.mxu0 %v311
        %425 = vmatprep.subr.mxu0 %v316
        %426 = vmatpush1.msra.mxu0 %v315
        %427 = vmatprep.subr.mxu0 0.0
        %428 = vmatpush1.msra.mxu0 0.0
        %429 = vmatprep.subr.mxu0 0.0
        %430 = vmatpush1.msra.mxu0 0.0
        %431 = vmatprep.subr.mxu0 0.0
        %432 = vmatpush1.msra.mxu0 0.0
        %433 = vmatprep.subr.mxu0 0.0
        %434 = vmatpush1.msra.mxu0 0.0
        %435 = vmatprep.subr.mxu0 0.0
        %436 = vmatpush1.msra.mxu0 0.0
        %437 = vmatprep.subr.mxu0 0.0
        %438 = vmatpush1.msra.mxu0 0.0
        %439 = vmatprep.subr.mxu0 0.0
        %440 = vmatpush1.msra.mxu0 0.0
        %441 = vmatprep.subr.mxu0 0.0
        %442 = vmatpush1.msra.mxu0 0.0
        %443 = vmatprep.subr.mxu0 0.0
        %444 = vmatpush1.msra.mxu0 0.0
        %445 = vmatprep.subr.mxu0 0.0
        %446 = vmatpush1.msra.mxu0 0.0
        %447 = vmatprep.subr.mxu0 0.0
        %448 = vmatpush1.msra.mxu0 0.0
        %449 = vmatprep.subr.mxu0 0.0
        %450 = vmatpush1.msra.mxu0 0.0
        %451 = vmatprep.subr.mxu0 0.0
        %452 = vmatpush1.msra.mxu0 0.0
        %453 = vmatprep.subr.mxu0 0.0
        %454 = vmatpush1.msra.mxu0 0.0
        %455 = vmatprep.subr.mxu0 0.0
        %456 = vmatpush1.msra.mxu0 0.0
        %457 = vmatprep.subr.mxu0 0.0
        %458 = vmatpush1.msra.mxu0 0.0
        %459 = vmatprep.subr.mxu0 0.0
        %460 = vmatpush1.msra.mxu0 0.0
        %461 = vmatprep.subr.mxu0 0.0
        %462 = vmatpush1.msra.mxu0 0.0
        %463 = vmatprep.subr.mxu0 0.0
        %464 = vmatpush1.msra.mxu0 0.0
        %465 = vmatprep.subr.mxu0 0.0
        %466 = vmatpush1.msra.mxu0 0.0
        %467 = vmatprep.subr.mxu0 0.0
        %468 = vmatpush1.msra.mxu0 0.0
        %469 = vmatprep.subr.mxu0 0.0
        %470 = vmatpush1.msra.mxu0 0.0
        %471 = vmatprep.subr.mxu0 0.0
        %472 = vmatpush1.msra.mxu0 0.0
        %473 = vmatprep.subr.mxu0 0.0
        %474 = vmatpush1.msra.mxu0 0.0
        %475 = vmatprep.subr.mxu0 0.0
        %476 = vmatpush1.msra.mxu0 0.0
        %477 = vmatprep.subr.mxu0 0.0
        %478 = vmatpush1.msra.mxu0 0.0
        %479 = vmatprep.subr.mxu0 0.0
        %480 = vmatpush1.msra.mxu0 0.0
        %481 = vmatprep.subr.mxu0 0.0
        %482 = vmatpush1.msra.mxu0 0.0
        %483 = vmatprep.subr.mxu0 0.0
        %484 = vmatpush1.msra.mxu0 0.0
        %485 = vmatprep.subr.mxu0 0.0
        %486 = vmatpush1.msra.mxu0 0.0
        %487 = vmatprep.mubr.f32.mxu0 0.0
        %488 = vmatmul.mubr.f32.gmra.mrb[0].mxu0 %v341
        %v489 = vpop.f32.mrb[0].mxu0
        %v490 = vadd.f32 %v330, %v489
        %v491 = vpop.f32.mrb[0].mxu0
        %v492 = vadd.f32 %v334, %v491
        %493 = vmatprep.mubr.f32.mxu0 0.0
        %494 = vmatmul.mubr.f32.gmra.mrb[0].mxu0 %v344
        %v495 = vpop.f32.mrb[0].mxu0
        %v496 = vadd.f32 %v330, %v495
        %v497 = vpop.f32.mrb[0].mxu0
        %v498 = vadd.f32 %v334, %v497
        %499 = vdwg.mxu0
        %500 = vst [vmem:[#allocation4] sm:$0xff] %v413
        %501 = vst [vmem:[#allocation4 + $0x8] sm:$0xff] %v415
        %502 = vst [vmem:[#allocation4 + $0x10] sm:$0xff] %v490
        %503 = vst [vmem:[#allocation4 + $0x18] sm:$0xff] %v492
        %504 = vst [vmem:[#allocation4 + $0x20] sm:$0xff] %v419
        %505 = vst [vmem:[#allocation4 + $0x28] sm:$0xff] %v421
        %506 = vst [vmem:[#allocation4 + $0x30] sm:$0xff] %v496
        %507 = vst [vmem:[#allocation4 + $0x38] sm:$0xff] %v498
        %v508 = vld [vmem:[#allocation5] sm:$0xff]
        %v509 = vld [vmem:[#allocation5 + $0x8] sm:$0xff]
        %v510 = vld [vmem:[#allocation5 + $0x10] sm:$0xff]
        %v511 = vld [vmem:[#allocation5 + $0x18] sm:$0xff]
        %v512 = vld [vmem:[#allocation5 + $0x20] sm:$0xff]
        %v513 = vld [vmem:[#allocation5 + $0x28] sm:$0xff]
        %v514 = vld [vmem:[#allocation5 + $0x30] sm:$0xff]
        %v515 = vld [vmem:[#allocation5 + $0x38] sm:$0xff]
        %v516 = vld [vmem:[#allocation5 + $0x40] sm:$0xff]
        %v517 = vld [vmem:[#allocation5 + $0x48] sm:$0xff]
        %v518 = vld [vmem:[#allocation5 + $0x50] sm:$0xff]
        %v519 = vld [vmem:[#allocation5 + $0x58] sm:$0xff]
        %v520 = vld [vmem:[#allocation5 + $0x60] sm:$0xff]
        %v521 = vld [vmem:[#allocation5 + $0x68] sm:$0xff]
        %v522 = vld [vmem:[#allocation5 + $0x70] sm:$0xff]
        %v523 = vld [vmem:[#allocation5 + $0x78] sm:$0xff]
        %v524 = vld [vmem:[#allocation5 + $0x80] sm:$0xff]
        %v525 = vld [vmem:[#allocation5 + $0x88] sm:$0xff]
        %v526 = vld [vmem:[#allocation5 + $0x90] sm:$0xff]
        %v527 = vld [vmem:[#allocation5 + $0x98] sm:$0xff]
        %v528 = vld [vmem:[#allocation5 + $0xa0] sm:$0xff]
        %v529 = vld [vmem:[#allocation5 + $0xa8] sm:$0xff]
        %v530 = vld [vmem:[#allocation5 + $0xb0] sm:$0xff]
        %v531 = vld [vmem:[#allocation5 + $0xb8] sm:$0xff]
        %v532 = vld [vmem:[#allocation5 + $0xc0] sm:$0xff]
        %v533 = vld [vmem:[#allocation5 + $0xc8] sm:$0xff]
        %v534 = vld [vmem:[#allocation5 + $0xd0] sm:$0xff]
        %v535 = vld [vmem:[#allocation5 + $0xd8] sm:$0xff]
        %v536 = vld [vmem:[#allocation5 + $0xe0] sm:$0xff]
        %v537 = vld [vmem:[#allocation5 + $0xe8] sm:$0xff]
        %v538 = vld [vmem:[#allocation5 + $0xf0] sm:$0xff]
        %v539 = vld [vmem:[#allocation5 + $0xf8] sm:$0xff]
        %v540 = vld [vmem:[#allocation5 + $0x100] sm:$0xff]
        %v541 = vld [vmem:[#allocation5 + $0x108] sm:$0xff]
        %v542 = vld [vmem:[#allocation5 + $0x110] sm:$0xff]
        %v543 = vld [vmem:[#allocation5 + $0x118] sm:$0xff]
        %v544 = vld [vmem:[#allocation5 + $0x120] sm:$0xff]
        %v545 = vld [vmem:[#allocation5 + $0x128] sm:$0xff]
        %v546 = vld [vmem:[#allocation5 + $0x130] sm:$0xff]
        %v547 = vld [vmem:[#allocation5 + $0x138] sm:$0xff]
        %v548 = vld [vmem:[#allocation5 + $0x140] sm:$0xff]
        %v549 = vld [vmem:[#allocation5 + $0x148] sm:$0xff]
        %v550 = vld [vmem:[#allocation5 + $0x150] sm:$0xff]
        %v551 = vld [vmem:[#allocation5 + $0x158] sm:$0xff]
        %v552 = vld [vmem:[#allocation5 + $0x160] sm:$0xff]
        %v553 = vld [vmem:[#allocation5 + $0x168] sm:$0xff]
        %v554 = vld [vmem:[#allocation5 + $0x170] sm:$0xff]
        %v555 = vld [vmem:[#allocation5 + $0x178] sm:$0xff]
        %v556 = vld [vmem:[#allocation5 + $0x180] sm:$0xff]
        %v557 = vld [vmem:[#allocation5 + $0x188] sm:$0xff]
        %v558 = vld [vmem:[#allocation5 + $0x190] sm:$0xff]
        %v559 = vld [vmem:[#allocation5 + $0x198] sm:$0xff]
        %v560 = vld [vmem:[#allocation5 + $0x1a0] sm:$0xff]
        %v561 = vld [vmem:[#allocation5 + $0x1a8] sm:$0xff]
        %v562 = vld [vmem:[#allocation5 + $0x1b0] sm:$0xff]
        %v563 = vld [vmem:[#allocation5 + $0x1b8] sm:$0xff]
        %v564 = vld [vmem:[#allocation5 + $0x1c0] sm:$0xff]
        %v565 = vld [vmem:[#allocation5 + $0x1c8] sm:$0xff]
        %v566 = vld [vmem:[#allocation5 + $0x1d0] sm:$0xff]
        %v567 = vld [vmem:[#allocation5 + $0x1d8] sm:$0xff]
        %v568 = vld [vmem:[#allocation5 + $0x1e0] sm:$0xff]
        %v569 = vld [vmem:[#allocation5 + $0x1e8] sm:$0xff]
        %v570 = vld [vmem:[#allocation5 + $0x1f0] sm:$0xff]
        %v571 = vld [vmem:[#allocation5 + $0x1f8] sm:$0xff]
        %v572 = vld [vmem:[#allocation2] sm:$0xff]
        %v573 = vld [vmem:[#allocation3] sm:$0xff]
        %s574 = smul.u32 0, 4
        %s575 = smul.addr %s574, 8
        %s576 = scalar_lea.vmem [#allocation4], %s575
        %v577 = vld [vmem:[%s576] sm:$0xff]
        %v578 = vld [vmem:[%s576 + $0x8] sm:$0xff]
        %v579 = vld [vmem:[%s576 + $0x10] sm:$0xff]
        %v580 = vld [vmem:[%s576 + $0x18] sm:$0xff]
        %581 = vmatprep.subr.mxu0 %v509
        %582 = vmatpush1.msra.mxu0 %v508
        %583 = vmatprep.subr.mxu0 %v513
        %584 = vmatpush1.msra.mxu0 %v512
        %585 = vmatprep.subr.mxu0 %v517
        %586 = vmatpush1.msra.mxu0 %v516
        %587 = vmatprep.subr.mxu0 %v521
        %588 = vmatpush1.msra.mxu0 %v520
        %589 = vmatprep.subr.mxu0 %v525
        %590 = vmatpush1.msra.mxu0 %v524
        %591 = vmatprep.subr.mxu0 %v529
        %592 = vmatpush1.msra.mxu0 %v528
        %593 = vmatprep.subr.mxu0 %v533
        %594 = vmatpush1.msra.mxu0 %v532
        %595 = vmatprep.subr.mxu0 %v537
        %596 = vmatpush1.msra.mxu0 %v536
        %597 = vmatprep.subr.mxu0 %v541
        %598 = vmatpush1.msra.mxu0 %v540
        %599 = vmatprep.subr.mxu0 %v545
        %600 = vmatpush1.msra.mxu0 %v544
        %601 = vmatprep.subr.mxu0 %v549
        %602 = vmatpush1.msra.mxu0 %v548
        %603 = vmatprep.subr.mxu0 %v553
        %604 = vmatpush1.msra.mxu0 %v552
        %605 = vmatprep.subr.mxu0 %v557
        %606 = vmatpush1.msra.mxu0 %v556
        %607 = vmatprep.subr.mxu0 %v561
        %608 = vmatpush1.msra.mxu0 %v560
        %609 = vmatprep.subr.mxu0 %v565
        %610 = vmatpush1.msra.mxu0 %v564
        %611 = vmatprep.subr.mxu0 %v569
        %612 = vmatpush1.msra.mxu0 %v568
        %613 = vmatprep.subr.mxu0 0.0
        %614 = vmatpush1.msra.mxu0 0.0
        %615 = vmatprep.subr.mxu0 0.0
        %616 = vmatpush1.msra.mxu0 0.0
        %617 = vmatprep.subr.mxu0 0.0
        %618 = vmatpush1.msra.mxu0 0.0
        %619 = vmatprep.subr.mxu0 0.0
        %620 = vmatpush1.msra.mxu0 0.0
        %621 = vmatprep.subr.mxu0 0.0
        %622 = vmatpush1.msra.mxu0 0.0
        %623 = vmatprep.subr.mxu0 0.0
        %624 = vmatpush1.msra.mxu0 0.0
        %625 = vmatprep.subr.mxu0 0.0
        %626 = vmatpush1.msra.mxu0 0.0
        %627 = vmatprep.subr.mxu0 0.0
        %628 = vmatpush1.msra.mxu0 0.0
        %629 = vmatprep.subr.mxu0 0.0
        %630 = vmatpush1.msra.mxu0 0.0
        %631 = vmatprep.subr.mxu0 0.0
        %632 = vmatpush1.msra.mxu0 0.0
        %633 = vmatprep.subr.mxu0 0.0
        %634 = vmatpush1.msra.mxu0 0.0
        %635 = vmatprep.subr.mxu0 0.0
        %636 = vmatpush1.msra.mxu0 0.0
        %637 = vmatprep.subr.mxu0 0.0
        %638 = vmatpush1.msra.mxu0 0.0
        %639 = vmatprep.subr.mxu0 0.0
        %640 = vmatpush1.msra.mxu0 0.0
        %641 = vmatprep.subr.mxu0 0.0
        %642 = vmatpush1.msra.mxu0 0.0
        %643 = vmatprep.subr.mxu0 0.0
        %644 = vmatpush1.msra.mxu0 0.0
        %645 = vmatprep.mubr.f32.mxu0 0.0
        %646 = vmatmul.mubr.f32.gmra.mrb[0].mxu0 %v572
        %v647 = vpop.f32.mrb[0].mxu0
        %v648 = vadd.f32 0.0, %v647
        %v649 = vpop.f32.mrb[0].mxu0
        %v650 = vadd.f32 0.0, %v649
        %651 = vdwg.mxu0
        %652 = vmatprep.subr.mxu0 %v511
        %653 = vmatpush1.msra.mxu0 %v510
        %654 = vmatprep.subr.mxu0 %v515
        %655 = vmatpush1.msra.mxu0 %v514
        %656 = vmatprep.subr.mxu0 %v519
        %657 = vmatpush1.msra.mxu0 %v518
        %658 = vmatprep.subr.mxu0 %v523
        %659 = vmatpush1.msra.mxu0 %v522
        %660 = vmatprep.subr.mxu0 %v527
        %661 = vmatpush1.msra.mxu0 %v526
        %662 = vmatprep.subr.mxu0 %v531
        %663 = vmatpush1.msra.mxu0 %v530
        %664 = vmatprep.subr.mxu0 %v535
        %665 = vmatpush1.msra.mxu0 %v534
        %666 = vmatprep.subr.mxu0 %v539
        %667 = vmatpush1.msra.mxu0 %v538
        %668 = vmatprep.subr.mxu0 %v543
        %669 = vmatpush1.msra.mxu0 %v542
        %670 = vmatprep.subr.mxu0 %v547
        %671 = vmatpush1.msra.mxu0 %v546
        %672 = vmatprep.subr.mxu0 %v551
        %673 = vmatpush1.msra.mxu0 %v550
        %674 = vmatprep.subr.mxu0 %v555
        %675 = vmatpush1.msra.mxu0 %v554
        %676 = vmatprep.subr.mxu0 %v559
        %677 = vmatpush1.msra.mxu0 %v558
        %678 = vmatprep.subr.mxu0 %v563
        %679 = vmatpush1.msra.mxu0 %v562
        %680 = vmatprep.subr.mxu0 %v567
        %681 = vmatpush1.msra.mxu0 %v566
        %682 = vmatprep.subr.mxu0 %v571
        %683 = vmatpush1.msra.mxu0 %v570
        %684 = vmatprep.subr.mxu0 0.0
        %685 = vmatpush1.msra.mxu0 0.0
        %686 = vmatprep.subr.mxu0 0.0
        %687 = vmatpush1.msra.mxu0 0.0
        %688 = vmatprep.subr.mxu0 0.0
        %689 = vmatpush1.msra.mxu0 0.0
        %690 = vmatprep.subr.mxu0 0.0
        %691 = vmatpush1.msra.mxu0 0.0
        %692 = vmatprep.subr.mxu0 0.0
        %693 = vmatpush1.msra.mxu0 0.0
        %694 = vmatprep.subr.mxu0 0.0
        %695 = vmatpush1.msra.mxu0 0.0
        %696 = vmatprep.subr.mxu0 0.0
        %697 = vmatpush1.msra.mxu0 0.0
        %698 = vmatprep.subr.mxu0 0.0
        %699 = vmatpush1.msra.mxu0 0.0
        %700 = vmatprep.subr.mxu0 0.0
        %701 = vmatpush1.msra.mxu0 0.0
        %702 = vmatprep.subr.mxu0 0.0
        %703 = vmatpush1.msra.mxu0 0.0
        %704 = vmatprep.subr.mxu0 0.0
        %705 = vmatpush1.msra.mxu0 0.0
        %706 = vmatprep.subr.mxu0 0.0
        %707 = vmatpush1.msra.mxu0 0.0
        %708 = vmatprep.subr.mxu0 0.0
        %709 = vmatpush1.msra.mxu0 0.0
        %710 = vmatprep.subr.mxu0 0.0
        %711 = vmatpush1.msra.mxu0 0.0
        %712 = vmatprep.subr.mxu0 0.0
        %713 = vmatpush1.msra.mxu0 0.0
        %714 = vmatprep.subr.mxu0 0.0
        %715 = vmatpush1.msra.mxu0 0.0
        %716 = vmatprep.mubr.f32.mxu0 0.0
        %717 = vmatmul.mubr.f32.gmra.mrb[0].mxu0 %v572
        %v718 = vpop.f32.mrb[0].mxu0
        %v719 = vadd.f32 0.0, %v718
        %v720 = vpop.f32.mrb[0].mxu0
        %v721 = vadd.f32 0.0, %v720
        %722 = vdwg.mxu0
        %v723 = vadd.f32 %v577, %v648
        %v724 = vadd.f32 %v578, %v650
        %v725 = vadd.f32 %v579, %v719
        %v726 = vadd.f32 %v580, %v721
        %v727 = vmul.f32 %v723, 0.5
        %v728 = vtanh.pop %v727
        %v729 = vmul.f32 %v728, 0.5
        %v730 = vadd.f32 %v729, 0.5
        %v731 = vmul.f32 %v724, 0.5
        %v732 = vtanh.pop %v731
        %v733 = vmul.f32 %v732, 0.5
        %v734 = vadd.f32 %v733, 0.5
        %v735 = vtanh.pop %v725
        %v736 = vmul.f32 %v726, 0.5
        %v737 = vtanh.pop %v736
        %v738 = vmul.f32 %v737, 0.5
        %v739 = vadd.f32 %v738, 0.5
        %v740 = vmul.f32 %v734, %v573
        %v741 = vmul.f32 %v730, %v735
        %v742 = vadd.f32 %v740, %v741
        %v743 = vtanh.pop %v742
        %v744 = vmul.f32 %v739, %v743
        %s745 = smul.u32 1, 4
        %s746 = smul.addr %s745, 8
        %s747 = scalar_lea.vmem [#allocation4], %s746
        %v748 = vld [vmem:[%s747] sm:$0xff]
        %v749 = vld [vmem:[%s747 + $0x8] sm:$0xff]
        %v750 = vld [vmem:[%s747 + $0x10] sm:$0xff]
        %v751 = vld [vmem:[%s747 + $0x18] sm:$0xff]
        %752 = vmatprep.subr.mxu0 %v509
        %753 = vmatpush1.msra.mxu0 %v508
        %754 = vmatprep.subr.mxu0 %v513
        %755 = vmatpush1.msra.mxu0 %v512
        %756 = vmatprep.subr.mxu0 %v517
        %757 = vmatpush1.msra.mxu0 %v516
        %758 = vmatprep.subr.mxu0 %v521
        %759 = vmatpush1.msra.mxu0 %v520
        %760 = vmatprep.subr.mxu0 %v525
        %761 = vmatpush1.msra.mxu0 %v524
        %762 = vmatprep.subr.mxu0 %v529
        %763 = vmatpush1.msra.mxu0 %v528
        %764 = vmatprep.subr.mxu0 %v533
        %765 = vmatpush1.msra.mxu0 %v532
        %766 = vmatprep.subr.mxu0 %v537
        %767 = vmatpush1.msra.mxu0 %v536
        %768 = vmatprep.subr.mxu0 %v541
        %769 = vmatpush1.msra.mxu0 %v540
        %770 = vmatprep.subr.mxu0 %v545
        %771 = vmatpush1.msra.mxu0 %v544
        %772 = vmatprep.subr.mxu0 %v549
        %773 = vmatpush1.msra.mxu0 %v548
        %774 = vmatprep.subr.mxu0 %v553
        %775 = vmatpush1.msra.mxu0 %v552
        %776 = vmatprep.subr.mxu0 %v557
        %777 = vmatpush1.msra.mxu0 %v556
        %778 = vmatprep.subr.mxu0 %v561
        %779 = vmatpush1.msra.mxu0 %v560
        %780 = vmatprep.subr.mxu0 %v565
        %781 = vmatpush1.msra.mxu0 %v564
        %782 = vmatprep.subr.mxu0 %v569
        %783 = vmatpush1.msra.mxu0 %v568
        %784 = vmatprep.subr.mxu0 0.0
        %785 = vmatpush1.msra.mxu0 0.0
        %786 = vmatprep.subr.mxu0 0.0
        %787 = vmatpush1.msra.mxu0 0.0
        %788 = vmatprep.subr.mxu0 0.0
        %789 = vmatpush1.msra.mxu0 0.0
        %790 = vmatprep.subr.mxu0 0.0
        %791 = vmatpush1.msra.mxu0 0.0
        %792 = vmatprep.subr.mxu0 0.0
        %793 = vmatpush1.msra.mxu0 0.0
        %794 = vmatprep.subr.mxu0 0.0
        %795 = vmatpush1.msra.mxu0 0.0
        %796 = vmatprep.subr.mxu0 0.0
        %797 = vmatpush1.msra.mxu0 0.0
        %798 = vmatprep.subr.mxu0 0.0
        %799 = vmatpush1.msra.mxu0 0.0
        %800 = vmatprep.subr.mxu0 0.0
        %801 = vmatpush1.msra.mxu0 0.0
        %802 = vmatprep.subr.mxu0 0.0
        %803 = vmatpush1.msra.mxu0 0.0
        %804 = vmatprep.subr.mxu0 0.0
        %805 = vmatpush1.msra.mxu0 0.0
        %806 = vmatprep.subr.mxu0 0.0
        %807 = vmatpush1.msra.mxu0 0.0
        %808 = vmatprep.subr.mxu0 0.0
        %809 = vmatpush1.msra.mxu0 0.0
        %810 = vmatprep.subr.mxu0 0.0
        %811 = vmatpush1.msra.mxu0 0.0
        %812 = vmatprep.subr.mxu0 0.0
        %813 = vmatpush1.msra.mxu0 0.0
        %814 = vmatprep.subr.mxu0 0.0
        %815 = vmatpush1.msra.mxu0 0.0
        %816 = vmatprep.mubr.f32.mxu0 0.0
        %817 = vmatmul.mubr.f32.gmra.mrb[0].mxu0 %v744
        %v818 = vpop.f32.mrb[0].mxu0
        %v819 = vadd.f32 0.0, %v818
        %v820 = vpop.f32.mrb[0].mxu0
        %v821 = vadd.f32 0.0, %v820
        %822 = vdwg.mxu0
        %823 = vmatprep.subr.mxu0 %v511
        %824 = vmatpush1.msra.mxu0 %v510
        %825 = vmatprep.subr.mxu0 %v515
        %826 = vmatpush1.msra.mxu0 %v514
        %827 = vmatprep.subr.mxu0 %v519
        %828 = vmatpush1.msra.mxu0 %v518
        %829 = vmatprep.subr.mxu0 %v523
        %830 = vmatpush1.msra.mxu0 %v522
        %831 = vmatprep.subr.mxu0 %v527
        %832 = vmatpush1.msra.mxu0 %v526
        %833 = vmatprep.subr.mxu0 %v531
        %834 = vmatpush1.msra.mxu0 %v530
        %835 = vmatprep.subr.mxu0 %v535
        %836 = vmatpush1.msra.mxu0 %v534
        %837 = vmatprep.subr.mxu0 %v539
        %838 = vmatpush1.msra.mxu0 %v538
        %839 = vmatprep.subr.mxu0 %v543
        %840 = vmatpush1.msra.mxu0 %v542
        %841 = vmatprep.subr.mxu0 %v547
        %842 = vmatpush1.msra.mxu0 %v546
        %843 = vmatprep.subr.mxu0 %v551
        %844 = vmatpush1.msra.mxu0 %v550
        %845 = vmatprep.subr.mxu0 %v555
        %846 = vmatpush1.msra.mxu0 %v554
        %847 = vmatprep.subr.mxu0 %v559
        %848 = vmatpush1.msra.mxu0 %v558
        %849 = vmatprep.subr.mxu0 %v563
        %850 = vmatpush1.msra.mxu0 %v562
        %851 = vmatprep.subr.mxu0 %v567
        %852 = vmatpush1.msra.mxu0 %v566
        %853 = vmatprep.subr.mxu0 %v571
        %854 = vmatpush1.msra.mxu0 %v570
        %855 = vmatprep.subr.mxu0 0.0
        %856 = vmatpush1.msra.mxu0 0.0
        %857 = vmatprep.subr.mxu0 0.0
        %858 = vmatpush1.msra.mxu0 0.0
        %859 = vmatprep.subr.mxu0 0.0
        %860 = vmatpush1.msra.mxu0 0.0
        %861 = vmatprep.subr.mxu0 0.0
        %862 = vmatpush1.msra.mxu0 0.0
        %863 = vmatprep.subr.mxu0 0.0
        %864 = vmatpush1.msra.mxu0 0.0
        %865 = vmatprep.subr.mxu0 0.0
        %866 = vmatpush1.msra.mxu0 0.0
        %867 = vmatprep.subr.mxu0 0.0
        %868 = vmatpush1.msra.mxu0 0.0
        %869 = vmatprep.subr.mxu0 0.0
        %870 = vmatpush1.msra.mxu0 0.0
        %871 = vmatprep.subr.mxu0 0.0
        %872 = vmatpush1.msra.mxu0 0.0
        %873 = vmatprep.subr.mxu0 0.0
        %874 = vmatpush1.msra.mxu0 0.0
        %875 = vmatprep.subr.mxu0 0.0
        %876 = vmatpush1.msra.mxu0 0.0
        %877 = vmatprep.subr.mxu0 0.0
        %878 = vmatpush1.msra.mxu0 0.0
        %879 = vmatprep.subr.mxu0 0.0
        %880 = vmatpush1.msra.mxu0 0.0
        %881 = vmatprep.subr.mxu0 0.0
        %882 = vmatpush1.msra.mxu0 0.0
        %883 = vmatprep.subr.mxu0 0.0
        %884 = vmatpush1.msra.mxu0 0.0
        %885 = vmatprep.subr.mxu0 0.0
        %886 = vmatpush1.msra.mxu0 0.0
        %887 = vmatprep.mubr.f32.mxu0 0.0
        %888 = vmatmul.mubr.f32.gmra.mrb[0].mxu0 %v744
        %v889 = vpop.f32.mrb[0].mxu0
        %v890 = vadd.f32 0.0, %v889
        %v891 = vpop.f32.mrb[0].mxu0
        %v892 = vadd.f32 0.0, %v891
        %893 = vdwg.mxu0
        %v894 = vadd.f32 %v748, %v819
        %v895 = vadd.f32 %v749, %v821
        %v896 = vadd.f32 %v750, %v890
        %v897 = vadd.f32 %v751, %v892
        %v898 = vmul.f32 %v894, 0.5
        %v899 = vtanh.pop %v898
        %v900 = vmul.f32 %v899, 0.5
        %v901 = vadd.f32 %v900, 0.5
        %v902 = vmul.f32 %v895, 0.5
        %v903 = vtanh.pop %v902
        %v904 = vmul.f32 %v903, 0.5
        %v905 = vadd.f32 %v904, 0.5
        %v906 = vtanh.pop %v896
        %v907 = vmul.f32 %v897, 0.5
        %v908 = vtanh.pop %v907
        %v909 = vmul.f32 %v908, 0.5
        %v910 = vadd.f32 %v909, 0.5
        %v911 = vmul.f32 %v905, %v742
        %v912 = vmul.f32 %v901, %v906
        %v913 = vadd.f32 %v911, %v912
        %v914 = vtanh.pop %v913
        %v915 = vmul.f32 %v910, %v914
        %916 = vst [vmem:[#allocation2] sm:$0xff] %v915
        %917 = vst [vmem:[#allocation3] sm:$0xff] %v913
        %p918 = scmp.eq.s32.totalorder %s25, 3
        // Predicated region
        $region57: #{tpu_custom_call.1} parent=43 // pred_check
          %p919 = pneg %p918
        $region58: #{tpu_custom_call.1} parent=43 // pred_check_branch
          %921 = sbr.rel (%p919) target = $region60
        $region59: #{tpu_custom_call.1} parent=43 // pred_region
          %v922 = vld [vmem:[#allocation8] sm:$0xff]
          %v923 = vld [vmem:[#allocation8 + $0x8] sm:$0xff]
          %v924 = vld [vmem:[#allocation8 + $0x10] sm:$0xff]
          %v925 = vld [vmem:[#allocation8 + $0x18] sm:$0xff]
          %v926 = vld [vmem:[#allocation8 + $0x20] sm:$0xff]
          %v927 = vld [vmem:[#allocation8 + $0x28] sm:$0xff]
          %v928 = vld [vmem:[#allocation8 + $0x30] sm:$0xff]
          %v929 = vld [vmem:[#allocation8 + $0x38] sm:$0xff]
          %v930 = vld [vmem:[#allocation8 + $0x40] sm:$0xff]
          %v931 = vld [vmem:[#allocation8 + $0x48] sm:$0xff]
          %v932 = vld [vmem:[#allocation8 + $0x50] sm:$0xff]
          %v933 = vld [vmem:[#allocation8 + $0x58] sm:$0xff]
          %v934 = vld [vmem:[#allocation8 + $0x60] sm:$0xff]
          %v935 = vld [vmem:[#allocation8 + $0x68] sm:$0xff]
          %v936 = vld [vmem:[#allocation8 + $0x70] sm:$0xff]
          %v937 = vld [vmem:[#allocation8 + $0x78] sm:$0xff]
          %v938 = vld [vmem:[%s5] sm:$0x1]
          %v940 = vlaneseq
          %v941 = vshrl.u32 %v940, 7
          %v942 = vsub.s32 0, %v941
          %v943 = vrot.slane %v938, %v942
          %945 = vmatprep.subr.mxu0 0.0
          %946 = vmatpush1.msra.mxu0 %v922
          %947 = vmatprep.subr.mxu0 0.0
          %948 = vmatpush1.msra.mxu0 %v923
          %949 = vmatprep.subr.mxu0 0.0
          %950 = vmatpush1.msra.mxu0 %v924
          %951 = vmatprep.subr.mxu0 0.0
          %952 = vmatpush1.msra.mxu0 %v925
          %953 = vmatprep.subr.mxu0 0.0
          %954 = vmatpush1.msra.mxu0 %v926
          %955 = vmatprep.subr.mxu0 0.0
          %956 = vmatpush1.msra.mxu0 %v927
          %957 = vmatprep.subr.mxu0 0.0
          %958 = vmatpush1.msra.mxu0 %v928
          %959 = vmatprep.subr.mxu0 0.0
          %960 = vmatpush1.msra.mxu0 %v929
          %961 = vmatprep.subr.mxu0 0.0
          %962 = vmatpush1.msra.mxu0 %v930
          %963 = vmatprep.subr.mxu0 0.0
          %964 = vmatpush1.msra.mxu0 %v931
          %965 = vmatprep.subr.mxu0 0.0
          %966 = vmatpush1.msra.mxu0 %v932
          %967 = vmatprep.subr.mxu0 0.0
          %968 = vmatpush1.msra.mxu0 %v933
          %969 = vmatprep.subr.mxu0 0.0
          %970 = vmatpush1.msra.mxu0 %v934
          %971 = vmatprep.subr.mxu0 0.0
          %972 = vmatpush1.msra.mxu0 %v935
          %973 = vmatprep.subr.mxu0 0.0
          %974 = vmatpush1.msra.mxu0 %v936
          %975 = vmatprep.subr.mxu0 0.0
          %976 = vmatpush1.msra.mxu0 %v937
          %977 = vmatprep.subr.mxu0 0.0
          %978 = vmatpush1.msra.mxu0 0.0
          %979 = vmatprep.subr.mxu0 0.0
          %980 = vmatpush1.msra.mxu0 0.0
          %981 = vmatprep.subr.mxu0 0.0
          %982 = vmatpush1.msra.mxu0 0.0
          %983 = vmatprep.subr.mxu0 0.0
          %984 = vmatpush1.msra.mxu0 0.0
          %985 = vmatprep.subr.mxu0 0.0
          %986 = vmatpush1.msra.mxu0 0.0
          %987 = vmatprep.subr.mxu0 0.0
          %988 = vmatpush1.msra.mxu0 0.0
          %989 = vmatprep.subr.mxu0 0.0
          %990 = vmatpush1.msra.mxu0 0.0
          %991 = vmatprep.subr.mxu0 0.0
          %992 = vmatpush1.msra.mxu0 0.0
          %993 = vmatprep.subr.mxu0 0.0
          %994 = vmatpush1.msra.mxu0 0.0
          %995 = vmatprep.subr.mxu0 0.0
          %996 = vmatpush1.msra.mxu0 0.0
          %997 = vmatprep.subr.mxu0 0.0
          %998 = vmatpush1.msra.mxu0 0.0
          %999 = vmatprep.subr.mxu0 0.0
          %1000 = vmatpush1.msra.mxu0 0.0
          %1001 = vmatprep.subr.mxu0 0.0
          %1002 = vmatpush1.msra.mxu0 0.0
          %1003 = vmatprep.subr.mxu0 0.0
          %1004 = vmatpush1.msra.mxu0 0.0
          %1005 = vmatprep.subr.mxu0 0.0
          %1006 = vmatpush1.msra.mxu0 0.0
          %1007 = vmatprep.subr.mxu0 0.0
          %1008 = vmatpush1.msra.mxu0 0.0
          %1009 = vmatprep.mubr.f32.mxu0 0.0
          %1010 = vmatmul.mubr.f32.gmra.mrb[0].mxu0 %v915
          %v1011 = vpop.f32.mrb[0].mxu0
          %v1012 = vadd.f32 %v943, %v1011
          %v1013 = vpop.f32.mrb[0].mxu0
          %1014 = vdwg.mxu0
          %1015 = vst [vmem:[#allocation10] sm:$0xff] %v1012
        $region60: #{tpu_custom_call.1} parent=43 // pred_fallthru
          _
        // Predicated region
        $region61: #{tpu_custom_call.1} parent=43 // pred_check
          %p1016 = pneg %p183
        $region62: #{tpu_custom_call.1} parent=43 // pred_check_branch
          %1018 = sbr.rel (%p1016) target = $region64
        $region63: #{tpu_custom_call.1} parent=43 // pred_region
          %s1020 = ssub.s32 128, 128
          %1021 = vsyncadd [#allocation7], %s1020
          %s1022 = smul.addr %s24, 128
          %s1023 = scalar_lea.hbm %s6, %s1022
          %s1025 = sshll.u32 [#allocation10], 4
          %s1026 = int_to_ptr.vmem [resolvable:$true] %s1025
          %1028 = dma.vmem_to_hbm [thread:$0]  %s1026, 128, %s1023, [#allocation7]
        $region64: #{tpu_custom_call.1} parent=43 // pred_fallthru
          _
        // Predicated region
        $region65: #{tpu_custom_call.1} parent=43 // pred_check
          %p1029 = pneg %p183
        $region66: #{tpu_custom_call.1} parent=43 // pred_check_branch
          %1031 = sbr.rel (%p1029) target = $region68
        $region67: #{tpu_custom_call.1} parent=43 // pred_region
          %1032 = dma.done [#allocation7], 128
        $region68: #{tpu_custom_call.1} parent=43 // pred_fallthru
          _
      $region44: #{tpu_custom_call.1} parent=5 // pred_fallthru
        _
      %p1033 = scmp.le.s32.totalorder 2, %s15
      // Predicated region
      $region69: #{tpu_custom_call.1} parent=5 // pred_check
        %p1034 = pneg %p1033
      $region70: #{tpu_custom_call.1} parent=5 // pred_check_branch
        %1036 = sbr.rel (%p1034) target = $region72
      $region71: #{tpu_custom_call.1} parent=5 // pred_region
        %s1037 = ssub.s32 %s15, 2
      $region72: #{tpu_custom_call.1} parent=5 // pred_fallthru
        _
    $region6: #{tpu_custom_call.1} parent=1 // loop_footer
      %s19 = sadd.s32 1, %s15
    $region7: #{tpu_custom_call.1} parent=1 // loop_footer_branch
      %14 = sbr.rel target = $region3
    $region8: #{tpu_custom_call.1} parent=1 // loop_exit
      _
    %1038 = vsyncpa [#allocation6], 1
    %s1039 = scalar_lea.sflag [#allocation6], 1
    %1040 = vsyncpa %s1039, 1
    %1041 = vsyncpa [#allocation9], 1
    %1042 = vsyncpa [#allocation7], 1
    %s1043 = scalar_lea.sflag [#allocation7], 1
    %1044 = vsyncpa %s1043, 1

</llo_original>
